<compile_context>
chip_gen: v7x
topology: tpu7x:2x2x1
jax: 0.10.0
libtpu: 0.0.40
codegen_flags: <defaults>
</compile_context>

<pallas_src>
import functools

import jax
import jax.numpy as jnp
from jax import lax
from jax.experimental import pallas as pl
from jax.experimental.pallas import tpu as pltpu


def _fused_subsample_kernel(p0_ref, p1_ref, p2_ref, p3_ref,
                            w1_ref, w2_ref, b1_ref, b2_ref, o_ref):
    """Fused Conv1d(k=3,s=2) -> Conv1d(k=3,s=2) for one batch element.

    p{r}_ref : (1, C_in, *)      phase r of the input time axis, p_r[c, j] = x[c, 4j+r]
    w1_ref   : (3, C_out, C_in)  tap-major conv1 weights (W1_k = w1[:, :, k])
    w2_ref   : (3, C_out, C_out) tap-major conv2 weights
    b1_ref   : (C_out, 1)
    b2_ref   : (C_out, 1)
    o_ref    : (1, C_out, T2)    final NCW output block
    """
    t2 = o_ref.shape[2]
    f32 = jnp.float32

    p0 = p0_ref[0]          # (C_in, T2 + 1)
    p1 = p1_ref[0]          # (C_in, T2 + 1)
    p2 = p2_ref[0]          # (C_in, T2 + 1)
    p3 = p3_ref[0]          # (C_in, T2)

    w10, w11, w12 = w1_ref[0], w1_ref[1], w1_ref[2]   # (C_out, C_in)
    w20, w21, w22 = w2_ref[0], w2_ref[1], w2_ref[2]   # (C_out, C_out)
    b1 = b1_ref[...]        # (C_out, 1)
    b2 = b2_ref[...]        # (C_out, 1)

    dot = functools.partial(jnp.dot, preferred_element_type=f32)

    # Conv1, split into even/odd output phases so conv2's stride-2 taps become
    # unit-stride slices:
    #   h[t]      = W1_0 x[2t] + W1_1 x[2t+1] + W1_2 x[2t+2] + b1
    #   h_even[j] = h[2j]   -> x[4j], x[4j+1], x[4j+2]   = p0[j], p1[j], p2[j]
    #   h_odd[j]  = h[2j+1] -> x[4j+2], x[4j+3], x[4j+4] = p2[j], p3[j], p0[j+1]
    h_even = dot(w10, p0) + dot(w11, p1) + dot(w12, p2) + b1            # (C_out, T2+1)
    h_odd = (dot(w10, p2[:, :t2]) + dot(w11, p3)
             + dot(w12, p0[:, 1:t2 + 1]) + b1)                          # (C_out, T2)

    # Conv2:
    #   y[t] = W2_0 h[2t] + W2_1 h[2t+1] + W2_2 h[2t+2] + b2
    #        = W2_0 h_even[t] + W2_1 h_odd[t] + W2_2 h_even[t+1] + b2
    y = (dot(w20, h_even[:, :t2]) + dot(w21, h_odd)
         + dot(w22, h_even[:, 1:t2 + 1]) + b2)                          # (C_out, T2)

    o_ref[0] = y.astype(o_ref.dtype)


def conv1d_subsampling(x, w1, b1, w2, b2):
    """Forward pass of Conv1dSubampling: Conv1d(k=3,s=2) -> Conv1d(k=3,s=2).

    x : (B, C_in, T) NCW (PyTorch layout)
    w1: (C_out, C_in, 3),  b1: (C_out,)
    w2: (C_out, C_out, 3), b2: (C_out,)
    returns (B, C_out, T2) NCW, T1 = (T-3)//2 + 1, T2 = (T1-3)//2 + 1.
    """
    B, C_in, T = x.shape
    C_out = w1.shape[0]
    T1 = (T - 3) // 2 + 1
    T2 = (T1 - 3) // 2 + 1
    assert T2 >= 1, "input too short for two k=3, s=2 convolutions"

    # Phase split of the time axis (plain XLA strided slices: a single pass over
    # x, no 3x im2col duplication, no transposes).  p_r[b, c, j] = x[b, c, 4j+r].
    p0 = x[:, :, 0::4][:, :, :T2 + 1]
    p1 = x[:, :, 1::4][:, :, :T2 + 1]
    p2 = x[:, :, 2::4][:, :, :T2 + 1]
    p3 = x[:, :, 3::4][:, :, :T2]

    # Tap-major weights: w*_t[k] = W_k with channels-out on sublanes.
    w1_t = jnp.transpose(w1, (2, 0, 1))          # (3, C_out, C_in)
    w2_t = jnp.transpose(w2, (2, 0, 1))          # (3, C_out, C_out)
    b1_c = b1.reshape(C_out, 1)
    b2_c = b2.reshape(C_out, 1)

    flops = 2 * 3 * B * (C_in * C_out * (2 * T2 + 1) + C_out * C_out * T2)
    bytes_accessed = 4 * (p0.size + p1.size + p2.size + p3.size
                          + w1_t.size + w2_t.size + b1.size + b2.size
                          + B * C_out * T2)

    return pl.pallas_call(
        _fused_subsample_kernel,
        out_shape=jax.ShapeDtypeStruct((B, C_out, T2), x.dtype),
        grid=(B,),
        in_specs=[
            pl.BlockSpec((1, C_in, T2 + 1), lambda b: (b, 0, 0)),
            pl.BlockSpec((1, C_in, T2 + 1), lambda b: (b, 0, 0)),
            pl.BlockSpec((1, C_in, T2 + 1), lambda b: (b, 0, 0)),
            pl.BlockSpec((1, C_in, T2), lambda b: (b, 0, 0)),
            pl.BlockSpec((3, C_out, C_in), lambda b: (0, 0, 0)),
            pl.BlockSpec((3, C_out, C_out), lambda b: (0, 0, 0)),
            pl.BlockSpec((C_out, 1), lambda b: (0, 0)),
            pl.BlockSpec((C_out, 1), lambda b: (0, 0)),
        ],
        out_specs=pl.BlockSpec((1, C_out, T2), lambda b: (b, 0, 0)),
        compiler_params=pltpu.CompilerParams(
            dimension_semantics=("parallel",)),
        cost_estimate=pl.CostEstimate(
            flops=flops, transcendentals=0, bytes_accessed=bytes_accessed),
    )(p0, p1, p2, p3, w1_t, w2_t, b1_c, b2_c)


def _reference(x, w1, b1, w2, b2):
    """Pure-JAX reference using lax.conv_general_dilated (matches torch Conv1d)."""
    dn = lax.conv_dimension_numbers(x.shape, w1.shape, ("NCH", "OIH", "NCH"))
    h = lax.conv_general_dilated(x, w1, (2,), "VALID", dimension_numbers=dn)
    h = h + b1[None, :, None]
    dn2 = lax.conv_dimension_numbers(h.shape, w2.shape, ("NCH", "OIH", "NCH"))
    y = lax.conv_general_dilated(h, w2, (2,), "VALID", dimension_numbers=dn2)
    return y + b2[None, :, None]


if __name__ == "__main__":
    key = jax.random.PRNGKey(0)
    k_x, k_w1, k_b1, k_w2, k_b2 = jax.random.split(key, 5)

    # Small shapes consistent with the module: in_channels=4, out_channels=8, T=16.
    B, C_in, C_out, T = 2, 4, 8, 16
    x = jax.random.normal(k_x, (B, C_in, T), jnp.float32)
    w1 = 0.1 * jax.random.normal(k_w1, (C_out, C_in, 3), jnp.float32)
    b1 = 0.1 * jax.random.normal(k_b1, (C_out,), jnp.float32)
    w2 = 0.1 * jax.random.normal(k_w2, (C_out, C_out, 3), jnp.float32)
    b2 = 0.1 * jax.random.normal(k_b2, (C_out,), jnp.float32)

    y = jax.jit(conv1d_subsampling)(x, w1, b1, w2, b2)
    jax.block_until_ready(y)

    # Correctness check vs. XLA conv reference.
    y_ref = _reference(x, w1, b1, w2, b2)
    T1 = (T - 3) // 2 + 1
    T2 = (T1 - 3) // 2 + 1
    assert y.shape == (B, C_out, T2), y.shape
    assert jnp.allclose(y, y_ref, atol=1e-3, rtol=1e-3), "mismatch vs reference"

    print("KERNEL_OK")
</pallas_src>

<mosaic_0001>
module attributes {stable_mosaic.version = 11 : i64} {
  func.func @_fused_subsample_kernel(%arg0: i32, %arg1: memref<1x4x4xf32, #tpu.memory_space<vmem>>, %arg2: memref<1x4x4xf32, #tpu.memory_space<vmem>>, %arg3: memref<1x4x4xf32, #tpu.memory_space<vmem>>, %arg4: memref<1x4x3xf32, #tpu.memory_space<vmem>>, %arg5: memref<3x8x4xf32, #tpu.memory_space<vmem>>, %arg6: memref<3x8x8xf32, #tpu.memory_space<vmem>>, %arg7: memref<8x1xf32, #tpu.memory_space<vmem>>, %arg8: memref<8x1xf32, #tpu.memory_space<vmem>>, %arg9: memref<1x8x3xf32, #tpu.memory_space<vmem>>) attributes {dimension_semantics = [#tpu.dimension_semantics<parallel>], iteration_bounds = array<i64: 2>, scalar_prefetch = 0 : i64, scratch_operands = 0 : i64, tpu.core_type = #tpu.core_type<tc>, window_params = [{transform_indices = @transform_0, window_bounds = array<i64: 1, 4, 4>}, {transform_indices = @transform_1, window_bounds = array<i64: 1, 4, 4>}, {transform_indices = @transform_2, window_bounds = array<i64: 1, 4, 4>}, {transform_indices = @transform_3, window_bounds = array<i64: 1, 4, 3>}, {pipeline_mode = #tpu.pipeline_mode<synchronous>, transform_indices = @transform_4, window_bounds = array<i64: 3, 8, 4>}, {pipeline_mode = #tpu.pipeline_mode<synchronous>, transform_indices = @transform_5, window_bounds = array<i64: 3, 8, 8>}, {pipeline_mode = #tpu.pipeline_mode<synchronous>, transform_indices = @transform_6, window_bounds = array<i64: 8, 1>}, {pipeline_mode = #tpu.pipeline_mode<synchronous>, transform_indices = @transform_7, window_bounds = array<i64: 8, 1>}, {transform_indices = @transform_8, window_bounds = array<i64: 1, 8, 3>}]} {
    %c0 = arith.constant 0 : index
    %c0_0 = arith.constant 0 : index
    %c0_1 = arith.constant 0 : index
    %0 = vector.load %arg1[%c0, %c0_0, %c0_1] : memref<1x4x4xf32, #tpu.memory_space<vmem>>, vector<1x4x4xf32>
    %1 = vector.shape_cast %0 : vector<1x4x4xf32> to vector<4x4xf32>
    %c0_2 = arith.constant 0 : index
    %c0_3 = arith.constant 0 : index
    %c0_4 = arith.constant 0 : index
    %2 = vector.load %arg2[%c0_2, %c0_3, %c0_4] : memref<1x4x4xf32, #tpu.memory_space<vmem>>, vector<1x4x4xf32>
    %3 = vector.shape_cast %2 : vector<1x4x4xf32> to vector<4x4xf32>
    %c0_5 = arith.constant 0 : index
    %c0_6 = arith.constant 0 : index
    %c0_7 = arith.constant 0 : index
    %4 = vector.load %arg3[%c0_5, %c0_6, %c0_7] : memref<1x4x4xf32, #tpu.memory_space<vmem>>, vector<1x4x4xf32>
    %5 = vector.shape_cast %4 : vector<1x4x4xf32> to vector<4x4xf32>
    %c0_8 = arith.constant 0 : index
    %c0_9 = arith.constant 0 : index
    %c0_10 = arith.constant 0 : index
    %6 = vector.load %arg4[%c0_8, %c0_9, %c0_10] : memref<1x4x3xf32, #tpu.memory_space<vmem>>, vector<1x4x3xf32>
    %7 = vector.shape_cast %6 : vector<1x4x3xf32> to vector<4x3xf32>
    %c0_11 = arith.constant 0 : index
    %c0_12 = arith.constant 0 : index
    %c0_13 = arith.constant 0 : index
    %8 = vector.load %arg5[%c0_11, %c0_12, %c0_13] : memref<3x8x4xf32, #tpu.memory_space<vmem>>, vector<1x8x4xf32>
    %9 = vector.shape_cast %8 : vector<1x8x4xf32> to vector<8x4xf32>
    %c1 = arith.constant 1 : index
    %c0_14 = arith.constant 0 : index
    %c0_15 = arith.constant 0 : index
    %10 = vector.load %arg5[%c1, %c0_14, %c0_15] : memref<3x8x4xf32, #tpu.memory_space<vmem>>, vector<1x8x4xf32>
    %11 = vector.shape_cast %10 : vector<1x8x4xf32> to vector<8x4xf32>
    %c2 = arith.constant 2 : index
    %c0_16 = arith.constant 0 : index
    %c0_17 = arith.constant 0 : index
    %12 = vector.load %arg5[%c2, %c0_16, %c0_17] : memref<3x8x4xf32, #tpu.memory_space<vmem>>, vector<1x8x4xf32>
    %13 = vector.shape_cast %12 : vector<1x8x4xf32> to vector<8x4xf32>
    %c0_18 = arith.constant 0 : index
    %c0_19 = arith.constant 0 : index
    %c0_20 = arith.constant 0 : index
    %14 = vector.load %arg6[%c0_18, %c0_19, %c0_20] : memref<3x8x8xf32, #tpu.memory_space<vmem>>, vector<1x8x8xf32>
    %15 = vector.shape_cast %14 : vector<1x8x8xf32> to vector<8x8xf32>
    %c1_21 = arith.constant 1 : index
    %c0_22 = arith.constant 0 : index
    %c0_23 = arith.constant 0 : index
    %16 = vector.load %arg6[%c1_21, %c0_22, %c0_23] : memref<3x8x8xf32, #tpu.memory_space<vmem>>, vector<1x8x8xf32>
    %17 = vector.shape_cast %16 : vector<1x8x8xf32> to vector<8x8xf32>
    %c2_24 = arith.constant 2 : index
    %c0_25 = arith.constant 0 : index
    %c0_26 = arith.constant 0 : index
    %18 = vector.load %arg6[%c2_24, %c0_25, %c0_26] : memref<3x8x8xf32, #tpu.memory_space<vmem>>, vector<1x8x8xf32>
    %19 = vector.shape_cast %18 : vector<1x8x8xf32> to vector<8x8xf32>
    %c0_27 = arith.constant 0 : index
    %c0_28 = arith.constant 0 : index
    %20 = vector.load %arg7[%c0_27, %c0_28] : memref<8x1xf32, #tpu.memory_space<vmem>>, vector<8x1xf32>
    %c0_29 = arith.constant 0 : index
    %c0_30 = arith.constant 0 : index
    %21 = vector.load %arg8[%c0_29, %c0_30] : memref<8x1xf32, #tpu.memory_space<vmem>>, vector<8x1xf32>
    %cst = arith.constant dense<0.000000e+00> : vector<8x4xf32>
    %22 = tpu.matmul %9, %1, %cst {dimension_numbers = #tpu.dot_dimension_numbers<[1], [0], [0], [1], [0, 0, 1, 1], [], []>} : vector<8x4xf32>, vector<4x4xf32>, vector<8x4xf32> -> vector<8x4xf32>
    %cst_31 = arith.constant dense<0.000000e+00> : vector<8x4xf32>
    %23 = tpu.matmul %11, %3, %cst_31 {dimension_numbers = #tpu.dot_dimension_numbers<[1], [0], [0], [1], [0, 0, 1, 1], [], []>} : vector<8x4xf32>, vector<4x4xf32>, vector<8x4xf32> -> vector<8x4xf32>
    %24 = arith.addf %22, %23 : vector<8x4xf32>
    %cst_32 = arith.constant dense<0.000000e+00> : vector<8x4xf32>
    %25 = tpu.matmul %13, %5, %cst_32 {dimension_numbers = #tpu.dot_dimension_numbers<[1], [0], [0], [1], [0, 0, 1, 1], [], []>} : vector<8x4xf32>, vector<4x4xf32>, vector<8x4xf32> -> vector<8x4xf32>
    %26 = arith.addf %24, %25 : vector<8x4xf32>
    %27 = vector.broadcast %20 : vector<8x1xf32> to vector<8x4xf32>
    %28 = arith.addf %26, %27 : vector<8x4xf32>
    %29 = vector.extract_strided_slice %5 {offsets = [0, 0], sizes = [4, 3], strides = [1, 1]} : vector<4x4xf32> to vector<4x3xf32>
    %cst_33 = arith.constant dense<0.000000e+00> : vector<8x3xf32>
    %30 = tpu.matmul %9, %29, %cst_33 {dimension_numbers = #tpu.dot_dimension_numbers<[1], [0], [0], [1], [0, 0, 1, 1], [], []>} : vector<8x4xf32>, vector<4x3xf32>, vector<8x3xf32> -> vector<8x3xf32>
    %cst_34 = arith.constant dense<0.000000e+00> : vector<8x3xf32>
    %31 = tpu.matmul %11, %7, %cst_34 {dimension_numbers = #tpu.dot_dimension_numbers<[1], [0], [0], [1], [0, 0, 1, 1], [], []>} : vector<8x4xf32>, vector<4x3xf32>, vector<8x3xf32> -> vector<8x3xf32>
    %32 = arith.addf %30, %31 : vector<8x3xf32>
    %33 = vector.extract_strided_slice %1 {offsets = [0, 1], sizes = [4, 3], strides = [1, 1]} : vector<4x4xf32> to vector<4x3xf32>
    %cst_35 = arith.constant dense<0.000000e+00> : vector<8x3xf32>
    %34 = tpu.matmul %13, %33, %cst_35 {dimension_numbers = #tpu.dot_dimension_numbers<[1], [0], [0], [1], [0, 0, 1, 1], [], []>} : vector<8x4xf32>, vector<4x3xf32>, vector<8x3xf32> -> vector<8x3xf32>
    %35 = arith.addf %32, %34 : vector<8x3xf32>
    %36 = vector.broadcast %20 : vector<8x1xf32> to vector<8x3xf32>
    %37 = arith.addf %35, %36 : vector<8x3xf32>
    %38 = vector.extract_strided_slice %28 {offsets = [0, 0], sizes = [8, 3], strides = [1, 1]} : vector<8x4xf32> to vector<8x3xf32>
    %cst_36 = arith.constant dense<0.000000e+00> : vector<8x3xf32>
    %39 = tpu.matmul %15, %38, %cst_36 {dimension_numbers = #tpu.dot_dimension_numbers<[1], [0], [0], [1], [0, 0, 1, 1], [], []>} : vector<8x8xf32>, vector<8x3xf32>, vector<8x3xf32> -> vector<8x3xf32>
    %cst_37 = arith.constant dense<0.000000e+00> : vector<8x3xf32>
    %40 = tpu.matmul %17, %37, %cst_37 {dimension_numbers = #tpu.dot_dimension_numbers<[1], [0], [0], [1], [0, 0, 1, 1], [], []>} : vector<8x8xf32>, vector<8x3xf32>, vector<8x3xf32> -> vector<8x3xf32>
    %41 = arith.addf %39, %40 : vector<8x3xf32>
    %42 = vector.extract_strided_slice %28 {offsets = [0, 1], sizes = [8, 3], strides = [1, 1]} : vector<8x4xf32> to vector<8x3xf32>
    %cst_38 = arith.constant dense<0.000000e+00> : vector<8x3xf32>
    %43 = tpu.matmul %19, %42, %cst_38 {dimension_numbers = #tpu.dot_dimension_numbers<[1], [0], [0], [1], [0, 0, 1, 1], [], []>} : vector<8x8xf32>, vector<8x3xf32>, vector<8x3xf32> -> vector<8x3xf32>
    %44 = arith.addf %41, %43 : vector<8x3xf32>
    %45 = vector.broadcast %21 : vector<8x1xf32> to vector<8x3xf32>
    %46 = arith.addf %44, %45 : vector<8x3xf32>
    %c0_39 = arith.constant 0 : index
    %c0_40 = arith.constant 0 : index
    %c0_41 = arith.constant 0 : index
    %47 = vector.load %arg9[%c0_39, %c0_40, %c0_41] : memref<1x8x3xf32, #tpu.memory_space<vmem>>, vector<1x8x3xf32>
    %48 = vector.shape_cast %47 : vector<1x8x3xf32> to vector<8x3xf32>
    %49 = vector.shape_cast %46 : vector<8x3xf32> to vector<1x8x3xf32>
    tpu.vector_store %arg9[%c0_39, %c0_40, %c0_41], %49 {strides = array<i32>} : memref<1x8x3xf32, #tpu.memory_space<vmem>>, vector<1x8x3xf32>,
    return
  }
  func.func @transform_0(%arg0: i32) -> (i32, i32, i32) {
    %c0_i32 = arith.constant 0 : i32
    %c0_i32_0 = arith.constant 0 : i32
    %c0_i32_1 = arith.constant 0 : i32
    return %arg0, %c0_i32, %c0_i32_0 : i32, i32, i32
  }
  func.func @transform_1(%arg0: i32) -> (i32, i32, i32) {
    %c0_i32 = arith.constant 0 : i32
    %c0_i32_0 = arith.constant 0 : i32
    %c0_i32_1 = arith.constant 0 : i32
    return %arg0, %c0_i32, %c0_i32_0 : i32, i32, i32
  }
  func.func @transform_2(%arg0: i32) -> (i32, i32, i32) {
    %c0_i32 = arith.constant 0 : i32
    %c0_i32_0 = arith.constant 0 : i32
    %c0_i32_1 = arith.constant 0 : i32
    return %arg0, %c0_i32, %c0_i32_0 : i32, i32, i32
  }
  func.func @transform_3(%arg0: i32) -> (i32, i32, i32) {
    %c0_i32 = arith.constant 0 : i32
    %c0_i32_0 = arith.constant 0 : i32
    %c0_i32_1 = arith.constant 0 : i32
    return %arg0, %c0_i32, %c0_i32_0 : i32, i32, i32
  }
  func.func @transform_4(%arg0: i32) -> (i32, i32, i32) {
    %c0_i32 = arith.constant 0 : i32
    %c0_i32_0 = arith.constant 0 : i32
    %c0_i32_1 = arith.constant 0 : i32
    %c0_i32_2 = arith.constant 0 : i32
    return %c0_i32, %c0_i32_0, %c0_i32_1 : i32, i32, i32
  }
  func.func @transform_5(%arg0: i32) -> (i32, i32, i32) {
    %c0_i32 = arith.constant 0 : i32
    %c0_i32_0 = arith.constant 0 : i32
    %c0_i32_1 = arith.constant 0 : i32
    %c0_i32_2 = arith.constant 0 : i32
    return %c0_i32, %c0_i32_0, %c0_i32_1 : i32, i32, i32
  }
  func.func @transform_6(%arg0: i32) -> (i32, i32) {
    %c0_i32 = arith.constant 0 : i32
    %c0_i32_0 = arith.constant 0 : i32
    %c0_i32_1 = arith.constant 0 : i32
    return %c0_i32, %c0_i32_0 : i32, i32
  }
  func.func @transform_7(%arg0: i32) -> (i32, i32) {
    %c0_i32 = arith.constant 0 : i32
    %c0_i32_0 = arith.constant 0 : i32
    %c0_i32_1 = arith.constant 0 : i32
    return %c0_i32, %c0_i32_0 : i32, i32
  }
  func.func @transform_8(%arg0: i32) -> (i32, i32, i32) {
    %c0_i32 = arith.constant 0 : i32
    %c0_i32_0 = arith.constant 0 : i32
    %c0_i32_1 = arith.constant 0 : i32
    return %arg0, %c0_i32, %c0_i32_0 : i32, i32, i32
  }
}

</mosaic_0001>

<llo_original>
// kernel: conv1d_subsampling.1
$region0: #{conv1d_subsampling.1}
  #allocation0 [shape = 'u32[]', space=smem, size = 0x4, offset = 0x4, fixed_abs, tag = 'smem constant byte address 0x4 - core index']
  #allocation1 [shape = 'u32[144,128]{1,0:T(1,128)}', space=vmem, size = 0x12000, scoped, tag = 'internal scratch']
  %s0 = inlined_call_operand.vmem [shape: f32[2,4,4], index: 0, kind: input, shape index: {}]
  %s1 = inlined_call_operand.vmem [shape: f32[2,4,4], index: 1, kind: input, shape index: {}]
  %s2 = inlined_call_operand.vmem [shape: f32[2,4,4], index: 2, kind: input, shape index: {}]
  %s3 = inlined_call_operand.vmem [shape: f32[2,4,3], index: 3, kind: input, shape index: {}]
  %s4 = inlined_call_operand.vmem [shape: f32[3,8,4], index: 4, kind: input, shape index: {}]
  %s5 = inlined_call_operand.vmem [shape: f32[3,8,8], index: 5, kind: input, shape index: {}]
  %s6 = inlined_call_operand.vmem [shape: f32[8,1], index: 6, kind: input, shape index: {}]
  %s7 = inlined_call_operand.vmem [shape: f32[8,1], index: 7, kind: input, shape index: {}]
  %s8 = inlined_call_operand.vmem [shape: f32[2,8,3], index: 8, kind: output, shape index: {}]
  %s9 = sld [smem:[#allocation0]]
  $region65: #{conv1d_subsampling.1} parent=0
    _
  %s11 = ssub.s32 1, %s9
  %s12 = scalar_select 0, %s11, %s9
  loop: start=0, step=1, limit=4
  $region2: #{conv1d_subsampling.1} parent=0 // loop_pre_header
    _
  $region3: #{conv1d_subsampling.1} parent=0 // loop_header
    %s14 = sphi 0, %s18
    %p15 = scmp.ge.s32.totalorder %s14, 4
    %s24 = sphi 0, %s26
    %s27 = sphi 0, %s24
    %s28 = sphi 0, %s27
    %s44 = sphi 0, %s28
    %s50 = sphi 0, %s52
    %s53 = sphi 0, %s50
    %s54 = sphi 0, %s53
    %s70 = sphi 0, %s54
    %s76 = sphi 0, %s78
    %s79 = sphi 0, %s76
    %s80 = sphi 0, %s79
    %s96 = sphi 0, %s80
    %s102 = sphi 0, %s104
    %s105 = sphi 0, %s102
    %s106 = sphi 0, %s105
    %s122 = sphi 0, %s106
    %s126 = sphi 0, %s126
    %s128 = sphi 0, %s126
    %s129 = sphi 0, %s128
    %s143 = sphi 0, %s129
    %s147 = sphi 0, %s147
    %s149 = sphi 0, %s147
    %s150 = sphi 0, %s149
    %s164 = sphi 0, %s150
    %s168 = sphi 0, %s168
    %s170 = sphi 0, %s168
    %s171 = sphi 0, %s170
    %s185 = sphi 0, %s171
    %s189 = sphi 0, %s189
    %s191 = sphi 0, %s189
    %s192 = sphi 0, %s191
    %s206 = sphi 0, %s192
    %s212 = sphi 0, %s214
    %s215 = sphi 0, %s212
    %s216 = sphi 0, %s215
    %s232 = sphi 0, %s216
  $region4: #{conv1d_subsampling.1} parent=0 // loop_header_branch
    %17 = sbr.rel (%p15) target = $region8
  $region5: #{conv1d_subsampling.1} parent=0 // loop_body
    %s19 = ssub.s32 %s14, 1
    %s20 = ssub.s32 %s14, 2
    %s21 = sadd.s32 %s14, 1
    %s22 = ssub.s32 %s14, %s21
    %p23 = scmp.eq.s32.totalorder %s22, 0
    %s25 = sadd.s32 %s24, 1
    %s26 = scalar_select %p23, %s24, %s25
    %p29 = pneg %p23
    %p30 = scmp.eq.s32.totalorder %s14, 1
    %p31 = por %p29, %p30
    %p32 = scmp.ne.s32.totalorder %s24, %s27
    %p33 = scmp.eq.s32.totalorder %s14, 0
    %p34 = por %p32, %p33
    %p35 = scmp.ne.s32.totalorder %s24, %s27
    %p36 = scmp.eq.s32.totalorder %s19, 1
    %p37 = por %p35, %p36
    %p38 = scmp.ne.s32.totalorder %s27, %s28
    %p39 = scmp.eq.s32.totalorder %s19, 0
    %p40 = por %p38, %p39
    %p41 = scmp.ne.s32.totalorder %s27, %s28
    %p42 = scmp.eq.s32.totalorder %s20, 1
    %p43 = por %p41, %p42
    %p45 = scmp.ne.s32.totalorder %s28, %s44
    %p46 = scmp.eq.s32.totalorder %s20, 0
    %p47 = por %p45, %p46
    %s48 = ssub.s32 %s14, %s21
    %p49 = scmp.eq.s32.totalorder %s48, 0
    %s51 = sadd.s32 %s50, 1
    %s52 = scalar_select %p49, %s50, %s51
    %p55 = pneg %p49
    %p56 = scmp.eq.s32.totalorder %s14, 1
    %p57 = por %p55, %p56
    %p58 = scmp.ne.s32.totalorder %s50, %s53
    %p59 = scmp.eq.s32.totalorder %s14, 0
    %p60 = por %p58, %p59
    %p61 = scmp.ne.s32.totalorder %s50, %s53
    %p62 = scmp.eq.s32.totalorder %s19, 1
    %p63 = por %p61, %p62
    %p64 = scmp.ne.s32.totalorder %s53, %s54
    %p65 = scmp.eq.s32.totalorder %s19, 0
    %p66 = por %p64, %p65
    %p67 = scmp.ne.s32.totalorder %s53, %s54
    %p68 = scmp.eq.s32.totalorder %s20, 1
    %p69 = por %p67, %p68
    %p71 = scmp.ne.s32.totalorder %s54, %s70
    %p72 = scmp.eq.s32.totalorder %s20, 0
    %p73 = por %p71, %p72
    %s74 = ssub.s32 %s14, %s21
    %p75 = scmp.eq.s32.totalorder %s74, 0
    %s77 = sadd.s32 %s76, 1
    %s78 = scalar_select %p75, %s76, %s77
    %p81 = pneg %p75
    %p82 = scmp.eq.s32.totalorder %s14, 1
    %p83 = por %p81, %p82
    %p84 = scmp.ne.s32.totalorder %s76, %s79
    %p85 = scmp.eq.s32.totalorder %s14, 0
    %p86 = por %p84, %p85
    %p87 = scmp.ne.s32.totalorder %s76, %s79
    %p88 = scmp.eq.s32.totalorder %s19, 1
    %p89 = por %p87, %p88
    %p90 = scmp.ne.s32.totalorder %s79, %s80
    %p91 = scmp.eq.s32.totalorder %s19, 0
    %p92 = por %p90, %p91
    %p93 = scmp.ne.s32.totalorder %s79, %s80
    %p94 = scmp.eq.s32.totalorder %s20, 1
    %p95 = por %p93, %p94
    %p97 = scmp.ne.s32.totalorder %s80, %s96
    %p98 = scmp.eq.s32.totalorder %s20, 0
    %p99 = por %p97, %p98
    %s100 = ssub.s32 %s14, %s21
    %p101 = scmp.eq.s32.totalorder %s100, 0
    %s103 = sadd.s32 %s102, 1
    %s104 = scalar_select %p101, %s102, %s103
    %p107 = pneg %p101
    %p108 = scmp.eq.s32.totalorder %s14, 1
    %p109 = por %p107, %p108
    %p110 = scmp.ne.s32.totalorder %s102, %s105
    %p111 = scmp.eq.s32.totalorder %s14, 0
    %p112 = por %p110, %p111
    %p113 = scmp.ne.s32.totalorder %s102, %s105
    %p114 = scmp.eq.s32.totalorder %s19, 1
    %p115 = por %p113, %p114
    %p116 = scmp.ne.s32.totalorder %s105, %s106
    %p117 = scmp.eq.s32.totalorder %s19, 0
    %p118 = por %p116, %p117
    %p119 = scmp.ne.s32.totalorder %s105, %s106
    %p120 = scmp.eq.s32.totalorder %s20, 1
    %p121 = por %p119, %p120
    %p123 = scmp.ne.s32.totalorder %s106, %s122
    %p124 = scmp.eq.s32.totalorder %s20, 0
    %p125 = por %p123, %p124
    %s127 = sadd.s32 %s126, 1
    %p130 = scmp.eq.s32.totalorder %s14, 1
    %p131 = scmp.ne.s32.totalorder %s126, %s128
    %p132 = scmp.eq.s32.totalorder %s14, 0
    %p133 = por %p131, %p132
    %p134 = scmp.ne.s32.totalorder %s126, %s128
    %p135 = scmp.eq.s32.totalorder %s19, 1
    %p136 = por %p134, %p135
    %p137 = scmp.ne.s32.totalorder %s128, %s129
    %p138 = scmp.eq.s32.totalorder %s19, 0
    %p139 = por %p137, %p138
    %p140 = scmp.ne.s32.totalorder %s128, %s129
    %p141 = scmp.eq.s32.totalorder %s20, 1
    %p142 = por %p140, %p141
    %p144 = scmp.ne.s32.totalorder %s129, %s143
    %p145 = scmp.eq.s32.totalorder %s20, 0
    %p146 = por %p144, %p145
    %s148 = sadd.s32 %s147, 1
    %p151 = scmp.eq.s32.totalorder %s14, 1
    %p152 = scmp.ne.s32.totalorder %s147, %s149
    %p153 = scmp.eq.s32.totalorder %s14, 0
    %p154 = por %p152, %p153
    %p155 = scmp.ne.s32.totalorder %s147, %s149
    %p156 = scmp.eq.s32.totalorder %s19, 1
    %p157 = por %p155, %p156
    %p158 = scmp.ne.s32.totalorder %s149, %s150
    %p159 = scmp.eq.s32.totalorder %s19, 0
    %p160 = por %p158, %p159
    %p161 = scmp.ne.s32.totalorder %s149, %s150
    %p162 = scmp.eq.s32.totalorder %s20, 1
    %p163 = por %p161, %p162
    %p165 = scmp.ne.s32.totalorder %s150, %s164
    %p166 = scmp.eq.s32.totalorder %s20, 0
    %p167 = por %p165, %p166
    %s169 = sadd.s32 %s168, 1
    %p172 = scmp.eq.s32.totalorder %s14, 1
    %p173 = scmp.ne.s32.totalorder %s168, %s170
    %p174 = scmp.eq.s32.totalorder %s14, 0
    %p175 = por %p173, %p174
    %p176 = scmp.ne.s32.totalorder %s168, %s170
    %p177 = scmp.eq.s32.totalorder %s19, 1
    %p178 = por %p176, %p177
    %p179 = scmp.ne.s32.totalorder %s170, %s171
    %p180 = scmp.eq.s32.totalorder %s19, 0
    %p181 = por %p179, %p180
    %p182 = scmp.ne.s32.totalorder %s170, %s171
    %p183 = scmp.eq.s32.totalorder %s20, 1
    %p184 = por %p182, %p183
    %p186 = scmp.ne.s32.totalorder %s171, %s185
    %p187 = scmp.eq.s32.totalorder %s20, 0
    %p188 = por %p186, %p187
    %s190 = sadd.s32 %s189, 1
    %p193 = scmp.eq.s32.totalorder %s14, 1
    %p194 = scmp.ne.s32.totalorder %s189, %s191
    %p195 = scmp.eq.s32.totalorder %s14, 0
    %p196 = por %p194, %p195
    %p197 = scmp.ne.s32.totalorder %s189, %s191
    %p198 = scmp.eq.s32.totalorder %s19, 1
    %p199 = por %p197, %p198
    %p200 = scmp.ne.s32.totalorder %s191, %s192
    %p201 = scmp.eq.s32.totalorder %s19, 0
    %p202 = por %p200, %p201
    %p203 = scmp.ne.s32.totalorder %s191, %s192
    %p204 = scmp.eq.s32.totalorder %s20, 1
    %p205 = por %p203, %p204
    %p207 = scmp.ne.s32.totalorder %s192, %s206
    %p208 = scmp.eq.s32.totalorder %s20, 0
    %p209 = por %p207, %p208
    %s210 = ssub.s32 %s14, %s21
    %p211 = scmp.eq.s32.totalorder %s210, 0
    %s213 = sadd.s32 %s212, 1
    %s214 = scalar_select %p211, %s212, %s213
    %p217 = pneg %p211
    %p218 = scmp.eq.s32.totalorder %s14, 1
    %p219 = por %p217, %p218
    %p220 = scmp.ne.s32.totalorder %s212, %s215
    %p221 = scmp.eq.s32.totalorder %s14, 0
    %p222 = por %p220, %p221
    %p223 = scmp.ne.s32.totalorder %s212, %s215
    %p224 = scmp.eq.s32.totalorder %s19, 1
    %p225 = por %p223, %p224
    %p226 = scmp.ne.s32.totalorder %s215, %s216
    %p227 = scmp.eq.s32.totalorder %s19, 0
    %p228 = por %p226, %p227
    %p229 = scmp.ne.s32.totalorder %s215, %s216
    %p230 = scmp.eq.s32.totalorder %s20, 1
    %p231 = por %p229, %p230
    %p233 = scmp.ne.s32.totalorder %s216, %s232
    %p234 = scmp.eq.s32.totalorder %s20, 0
    %p235 = por %p233, %p234
    %p236 = scmp.le.s32.totalorder 1, %s14
    %p237 = scmp.lt.s32.totalorder %s14, 3
    %p238 = pnand %p236, %p237
    %p239 = pneg %p238
    // Predicated region
    $region9: #{conv1d_subsampling.1} parent=5 // pred_check
      _
    $region10: #{conv1d_subsampling.1} parent=5 // pred_check_branch
      %241 = sbr.rel (%p238) target = $region12
    $region11: #{conv1d_subsampling.1} parent=5 // pred_region
      %s242 = ssub.s32 %s14, 1
      // Predicated region
      $region13: #{conv1d_subsampling.1} parent=11 // pred_check
        %p243 = pneg %p139
      $region14: #{conv1d_subsampling.1} parent=11 // pred_check_branch
        %245 = sbr.rel (%p243) target = $region16
      $region15: #{conv1d_subsampling.1} parent=11 // pred_region
        _
      $region16: #{conv1d_subsampling.1} parent=11 // pred_fallthru
        _
      // Predicated region
      $region17: #{conv1d_subsampling.1} parent=11 // pred_check
        %p246 = pneg %p160
      $region18: #{conv1d_subsampling.1} parent=11 // pred_check_branch
        %248 = sbr.rel (%p246) target = $region20
      $region19: #{conv1d_subsampling.1} parent=11 // pred_region
        _
      $region20: #{conv1d_subsampling.1} parent=11 // pred_fallthru
        _
      // Predicated region
      $region21: #{conv1d_subsampling.1} parent=11 // pred_check
        %p249 = pneg %p181
      $region22: #{conv1d_subsampling.1} parent=11 // pred_check_branch
        %251 = sbr.rel (%p249) target = $region24
      $region23: #{conv1d_subsampling.1} parent=11 // pred_region
        _
      $region24: #{conv1d_subsampling.1} parent=11 // pred_fallthru
        _
      // Predicated region
      $region25: #{conv1d_subsampling.1} parent=11 // pred_check
        %p252 = pneg %p202
      $region26: #{conv1d_subsampling.1} parent=11 // pred_check_branch
        %254 = sbr.rel (%p252) target = $region28
      $region27: #{conv1d_subsampling.1} parent=11 // pred_region
        _
      $region28: #{conv1d_subsampling.1} parent=11 // pred_fallthru
        _
    $region12: #{conv1d_subsampling.1} parent=5 // pred_fallthru
      _
    %p255 = scmp.lt.s32.totalorder %s14, 2
    // Predicated region
    $region29: #{conv1d_subsampling.1} parent=5 // pred_check
      %p256 = pneg %p255
    $region30: #{conv1d_subsampling.1} parent=5 // pred_check_branch
      %258 = sbr.rel (%p256) target = $region32
    $region31: #{conv1d_subsampling.1} parent=5 // pred_region
      // Predicated region
      $region33: #{conv1d_subsampling.1} parent=31 // pred_check
        %p259 = pneg %p34
      $region34: #{conv1d_subsampling.1} parent=31 // pred_check_branch
        %261 = sbr.rel (%p259) target = $region36
      $region35: #{conv1d_subsampling.1} parent=31 // pred_region
        %p262 = scmp.lt.s32.totalorder %s14, 1
        %s263 = scalar_select %p262, %s14, 1
        %s264 = smul.addr %s263, 4
        %s265 = scalar_lea.vmem %s0, %s264
      $region36: #{conv1d_subsampling.1} parent=31 // pred_fallthru
        _
      // Predicated region
      $region37: #{conv1d_subsampling.1} parent=31 // pred_check
        %p266 = pneg %p60
      $region38: #{conv1d_subsampling.1} parent=31 // pred_check_branch
        %268 = sbr.rel (%p266) target = $region40
      $region39: #{conv1d_subsampling.1} parent=31 // pred_region
        %p269 = scmp.lt.s32.totalorder %s14, 1
        %s270 = scalar_select %p269, %s14, 1
        %s271 = smul.addr %s270, 4
        %s272 = scalar_lea.vmem %s1, %s271
      $region40: #{conv1d_subsampling.1} parent=31 // pred_fallthru
        _
      // Predicated region
      $region41: #{conv1d_subsampling.1} parent=31 // pred_check
        %p273 = pneg %p86
      $region42: #{conv1d_subsampling.1} parent=31 // pred_check_branch
        %275 = sbr.rel (%p273) target = $region44
      $region43: #{conv1d_subsampling.1} parent=31 // pred_region
        %p276 = scmp.lt.s32.totalorder %s14, 1
        %s277 = scalar_select %p276, %s14, 1
        %s278 = smul.addr %s277, 4
        %s279 = scalar_lea.vmem %s2, %s278
      $region44: #{conv1d_subsampling.1} parent=31 // pred_fallthru
        _
      // Predicated region
      $region45: #{conv1d_subsampling.1} parent=31 // pred_check
        %p280 = pneg %p112
      $region46: #{conv1d_subsampling.1} parent=31 // pred_check_branch
        %282 = sbr.rel (%p280) target = $region48
      $region47: #{conv1d_subsampling.1} parent=31 // pred_region
        %p283 = scmp.lt.s32.totalorder %s14, 1
        %s284 = scalar_select %p283, %s14, 1
        %s285 = smul.addr %s284, 4
        %s286 = scalar_lea.vmem %s3, %s285
      $region48: #{conv1d_subsampling.1} parent=31 // pred_fallthru
        _
    $region32: #{conv1d_subsampling.1} parent=5 // pred_fallthru
      _
    %p287 = scmp.le.s32.totalorder 1, %s14
    %p288 = scmp.lt.s32.totalorder %s14, 3
    %p289 = pnand %p287, %p288
    %p290 = pneg %p289
    // Predicated region
    $region49: #{conv1d_subsampling.1} parent=5 // pred_check
      _
    $region50: #{conv1d_subsampling.1} parent=5 // pred_check_branch
      %292 = sbr.rel (%p289) target = $region52
    $region51: #{conv1d_subsampling.1} parent=5 // pred_region
      %s293 = ssub.s32 %s14, 1
      %p294 = scmp.lt.s32.totalorder %s19, 1
      %s295 = scalar_select %p294, %s19, 1
      %s296 = smul.addr %s295, 4
      %s297 = scalar_lea.vmem %s0, %s296
      %p298 = pneg %p40
      %p299 = pneg %p37
      %p300 = scmp.lt.s32.totalorder %s19, 1
      %s301 = scalar_select %p300, %s19, 1
      %s302 = smul.addr %s301, 4
      %s303 = scalar_lea.vmem %s1, %s302
      %p304 = pneg %p66
      %p305 = pneg %p63
      %p306 = scmp.lt.s32.totalorder %s19, 1
      %s307 = scalar_select %p306, %s19, 1
      %s308 = smul.addr %s307, 4
      %s309 = scalar_lea.vmem %s2, %s308
      %p310 = pneg %p92
      %p311 = pneg %p89
      %p312 = scmp.lt.s32.totalorder %s19, 1
      %s313 = scalar_select %p312, %s19, 1
      %s314 = smul.addr %s313, 4
      %s315 = scalar_lea.vmem %s3, %s314
      %p316 = pneg %p118
      %p317 = pneg %p115
      %p318 = pneg %p139
      %p319 = pneg %p136
      %p320 = pneg %p160
      %p321 = pneg %p157
      %p322 = pneg %p181
      %p323 = pneg %p178
      %p324 = pneg %p202
      %p325 = pneg %p199
      %p326 = pneg %p228
      %p327 = pneg %p225
      %p328 = scmp.lt.s32.totalorder %s19, 1
      %s329 = scalar_select %p328, %s19, 1
      %s330 = smul.addr %s329, 8
      %s331 = scalar_lea.vmem %s8, %s330
      %p332 = scmp.lt.s32.totalorder %s19, 1
      %s333 = scalar_select %p332, %s19, 1
      %s334 = smul.addr %s333, 4
      %s335 = scalar_lea.vmem %s0, %s334
      %p336 = scmp.lt.s32.totalorder %s19, 1
      %s337 = scalar_select %p336, %s19, 1
      %s338 = smul.addr %s337, 4
      %s339 = scalar_lea.vmem %s1, %s338
      %p340 = scmp.lt.s32.totalorder %s19, 1
      %s341 = scalar_select %p340, %s19, 1
      %s342 = smul.addr %s341, 4
      %s343 = scalar_lea.vmem %s2, %s342
      %p344 = scmp.lt.s32.totalorder %s19, 1
      %s345 = scalar_select %p344, %s19, 1
      %s346 = smul.addr %s345, 4
      %s347 = scalar_lea.vmem %s3, %s346
      %p348 = scmp.lt.s32.totalorder %s19, 1
      %s349 = scalar_select %p348, %s19, 1
      %s350 = smul.addr %s349, 8
      %s351 = scalar_lea.vmem %s8, %s350
      %v352 = vld [vmem:[%s335] sm:$0xf]
      %v353 = vld [vmem:[%s339] sm:$0xf]
      %v354 = vld [vmem:[%s343] sm:$0xf]
      %v355 = vld [vmem:[%s347] sm:$0xf]
      %v356 = vld [vmem:[%s4] sm:$0xff]
      %s357 = scalar_lea.vmem %s4, 8
      %v358 = vld [vmem:[%s357] sm:$0xff]
      %s359 = scalar_lea.vmem %s4, 16
      %v360 = vld [vmem:[%s359] sm:$0xff]
      %v361 = vld [vmem:[%s5] sm:$0xff]
      %s362 = scalar_lea.vmem %s5, 8
      %v363 = vld [vmem:[%s362] sm:$0xff]
      %s364 = scalar_lea.vmem %s5, 16
      %v365 = vld [vmem:[%s364] sm:$0xff]
      %v366 = vld [vmem:[%s6] sm:$0xff]
      %v367 = vld [vmem:[%s7] sm:$0xff]
      %vm368 = vcmask 31744
      %v370 = vsel %vm368, %v358, 0
      %vm372 = vcmask 1043456
      %v374 = vsel %vm372, %v353, 0
      %376 = vmatprep.subr.mxu0 0.0
      %377 = vmatpush1.msra.mxu0 %v374
      %378 = vmatprep.subr.mxu0 0.0
      %379 = vmatpush1.msra.mxu0 0.0
      %380 = vmatprep.subr.mxu0 0.0
      %381 = vmatpush1.msra.mxu0 0.0
      %382 = vmatprep.subr.mxu0 0.0
      %383 = vmatpush1.msra.mxu0 0.0
      %384 = vmatprep.subr.mxu0 0.0
      %385 = vmatpush1.msra.mxu0 0.0
      %386 = vmatprep.subr.mxu0 0.0
      %387 = vmatpush1.msra.mxu0 0.0
      %388 = vmatprep.subr.mxu0 0.0
      %389 = vmatpush1.msra.mxu0 0.0
      %390 = vmatprep.subr.mxu0 0.0
      %391 = vmatpush1.msra.mxu0 0.0
      %392 = vmatprep.subr.mxu0 0.0
      %393 = vmatpush1.msra.mxu0 0.0
      %394 = vmatprep.subr.mxu0 0.0
      %395 = vmatpush1.msra.mxu0 0.0
      %396 = vmatprep.subr.mxu0 0.0
      %397 = vmatpush1.msra.mxu0 0.0
      %398 = vmatprep.subr.mxu0 0.0
      %399 = vmatpush1.msra.mxu0 0.0
      %400 = vmatprep.subr.mxu0 0.0
      %401 = vmatpush1.msra.mxu0 0.0
      %402 = vmatprep.subr.mxu0 0.0
      %403 = vmatpush1.msra.mxu0 0.0
      %404 = vmatprep.subr.mxu0 0.0
      %405 = vmatpush1.msra.mxu0 0.0
      %406 = vmatprep.subr.mxu0 0.0
      %407 = vmatpush1.msra.mxu0 0.0
      %408 = vmatprep.subr.mxu0 0.0
      %409 = vmatpush1.msra.mxu0 0.0
      %410 = vmatprep.subr.mxu0 0.0
      %411 = vmatpush1.msra.mxu0 0.0
      %412 = vmatprep.subr.mxu0 0.0
      %413 = vmatpush1.msra.mxu0 0.0
      %414 = vmatprep.subr.mxu0 0.0
      %415 = vmatpush1.msra.mxu0 0.0
      %416 = vmatprep.subr.mxu0 0.0
      %417 = vmatpush1.msra.mxu0 0.0
      %418 = vmatprep.subr.mxu0 0.0
      %419 = vmatpush1.msra.mxu0 0.0
      %420 = vmatprep.subr.mxu0 0.0
      %421 = vmatpush1.msra.mxu0 0.0
      %422 = vmatprep.subr.mxu0 0.0
      %423 = vmatpush1.msra.mxu0 0.0
      %424 = vmatprep.subr.mxu0 0.0
      %425 = vmatpush1.msra.mxu0 0.0
      %426 = vmatprep.subr.mxu0 0.0
      %427 = vmatpush1.msra.mxu0 0.0
      %428 = vmatprep.subr.mxu0 0.0
      %429 = vmatpush1.msra.mxu0 0.0
      %430 = vmatprep.subr.mxu0 0.0
      %431 = vmatpush1.msra.mxu0 0.0
      %432 = vmatprep.subr.mxu0 0.0
      %433 = vmatpush1.msra.mxu0 0.0
      %434 = vmatprep.subr.mxu0 0.0
      %435 = vmatpush1.msra.mxu0 0.0
      %436 = vmatprep.subr.mxu0 0.0
      %437 = vmatpush1.msra.mxu0 0.0
      %438 = vmatprep.subr.mxu0 0.0
      %439 = vmatpush1.msra.mxu0 0.0
      %440 = vmatprep.mubr.f32.mxu0 0.0
      %441 = vmatmul.mubr.f32.gmra.mrb[0].mxu0 %v370
      %v442 = vpop.f32.mrb[0].mxu0
      %v443 = vadd.f32 0.0, %v442
      %v444 = vpop.f32.mrb[0].mxu0
      %445 = vdwg.mxu0
      %v447 = vsel %vm368, %v356, 0
      %v450 = vsel %vm372, %v352, 0
      %452 = vmatprep.subr.mxu0 0.0
      %453 = vmatpush1.msra.mxu0 %v450
      %454 = vmatprep.subr.mxu0 0.0
      %455 = vmatpush1.msra.mxu0 0.0
      %456 = vmatprep.subr.mxu0 0.0
      %457 = vmatpush1.msra.mxu0 0.0
      %458 = vmatprep.subr.mxu0 0.0
      %459 = vmatpush1.msra.mxu0 0.0
      %460 = vmatprep.subr.mxu0 0.0
      %461 = vmatpush1.msra.mxu0 0.0
      %462 = vmatprep.subr.mxu0 0.0
      %463 = vmatpush1.msra.mxu0 0.0
      %464 = vmatprep.subr.mxu0 0.0
      %465 = vmatpush1.msra.mxu0 0.0
      %466 = vmatprep.subr.mxu0 0.0
      %467 = vmatpush1.msra.mxu0 0.0
      %468 = vmatprep.subr.mxu0 0.0
      %469 = vmatpush1.msra.mxu0 0.0
      %470 = vmatprep.subr.mxu0 0.0
      %471 = vmatpush1.msra.mxu0 0.0
      %472 = vmatprep.subr.mxu0 0.0
      %473 = vmatpush1.msra.mxu0 0.0
      %474 = vmatprep.subr.mxu0 0.0
      %475 = vmatpush1.msra.mxu0 0.0
      %476 = vmatprep.subr.mxu0 0.0
      %477 = vmatpush1.msra.mxu0 0.0
      %478 = vmatprep.subr.mxu0 0.0
      %479 = vmatpush1.msra.mxu0 0.0
      %480 = vmatprep.subr.mxu0 0.0
      %481 = vmatpush1.msra.mxu0 0.0
      %482 = vmatprep.subr.mxu0 0.0
      %483 = vmatpush1.msra.mxu0 0.0
      %484 = vmatprep.subr.mxu0 0.0
      %485 = vmatpush1.msra.mxu0 0.0
      %486 = vmatprep.subr.mxu0 0.0
      %487 = vmatpush1.msra.mxu0 0.0
      %488 = vmatprep.subr.mxu0 0.0
      %489 = vmatpush1.msra.mxu0 0.0
      %490 = vmatprep.subr.mxu0 0.0
      %491 = vmatpush1.msra.mxu0 0.0
      %492 = vmatprep.subr.mxu0 0.0
      %493 = vmatpush1.msra.mxu0 0.0
      %494 = vmatprep.subr.mxu0 0.0
      %495 = vmatpush1.msra.mxu0 0.0
      %496 = vmatprep.subr.mxu0 0.0
      %497 = vmatpush1.msra.mxu0 0.0
      %498 = vmatprep.subr.mxu0 0.0
      %499 = vmatpush1.msra.mxu0 0.0
      %500 = vmatprep.subr.mxu0 0.0
      %501 = vmatpush1.msra.mxu0 0.0
      %502 = vmatprep.subr.mxu0 0.0
      %503 = vmatpush1.msra.mxu0 0.0
      %504 = vmatprep.subr.mxu0 0.0
      %505 = vmatpush1.msra.mxu0 0.0
      %506 = vmatprep.subr.mxu0 0.0
      %507 = vmatpush1.msra.mxu0 0.0
      %508 = vmatprep.subr.mxu0 0.0
      %509 = vmatpush1.msra.mxu0 0.0
      %510 = vmatprep.subr.mxu0 0.0
      %511 = vmatpush1.msra.mxu0 0.0
      %512 = vmatprep.subr.mxu0 0.0
      %513 = vmatpush1.msra.mxu0 0.0
      %514 = vmatprep.subr.mxu0 0.0
      %515 = vmatpush1.msra.mxu0 0.0
      %516 = vmatprep.mubr.f32.mxu0 0.0
      %517 = vmatmul.mubr.f32.gmra.mrb[0].mxu0 %v447
      %v518 = vpop.f32.mrb[0].mxu0
      %v519 = vadd.f32 %v443, %v518
      %v520 = vpop.f32.mrb[0].mxu0
      %521 = vdwg.mxu0
      %v523 = vsel %vm368, %v360, 0
      %v526 = vsel %vm372, %v354, 0
      %528 = vmatprep.subr.mxu0 0.0
      %529 = vmatpush1.msra.mxu0 %v526
      %530 = vmatprep.subr.mxu0 0.0
      %531 = vmatpush1.msra.mxu0 0.0
      %532 = vmatprep.subr.mxu0 0.0
      %533 = vmatpush1.msra.mxu0 0.0
      %534 = vmatprep.subr.mxu0 0.0
      %535 = vmatpush1.msra.mxu0 0.0
      %536 = vmatprep.subr.mxu0 0.0
      %537 = vmatpush1.msra.mxu0 0.0
      %538 = vmatprep.subr.mxu0 0.0
      %539 = vmatpush1.msra.mxu0 0.0
      %540 = vmatprep.subr.mxu0 0.0
      %541 = vmatpush1.msra.mxu0 0.0
      %542 = vmatprep.subr.mxu0 0.0
      %543 = vmatpush1.msra.mxu0 0.0
      %544 = vmatprep.subr.mxu0 0.0
      %545 = vmatpush1.msra.mxu0 0.0
      %546 = vmatprep.subr.mxu0 0.0
      %547 = vmatpush1.msra.mxu0 0.0
      %548 = vmatprep.subr.mxu0 0.0
      %549 = vmatpush1.msra.mxu0 0.0
      %550 = vmatprep.subr.mxu0 0.0
      %551 = vmatpush1.msra.mxu0 0.0
      %552 = vmatprep.subr.mxu0 0.0
      %553 = vmatpush1.msra.mxu0 0.0
      %554 = vmatprep.subr.mxu0 0.0
      %555 = vmatpush1.msra.mxu0 0.0
      %556 = vmatprep.subr.mxu0 0.0
      %557 = vmatpush1.msra.mxu0 0.0
      %558 = vmatprep.subr.mxu0 0.0
      %559 = vmatpush1.msra.mxu0 0.0
      %560 = vmatprep.subr.mxu0 0.0
      %561 = vmatpush1.msra.mxu0 0.0
      %562 = vmatprep.subr.mxu0 0.0
      %563 = vmatpush1.msra.mxu0 0.0
      %564 = vmatprep.subr.mxu0 0.0
      %565 = vmatpush1.msra.mxu0 0.0
      %566 = vmatprep.subr.mxu0 0.0
      %567 = vmatpush1.msra.mxu0 0.0
      %568 = vmatprep.subr.mxu0 0.0
      %569 = vmatpush1.msra.mxu0 0.0
      %570 = vmatprep.subr.mxu0 0.0
      %571 = vmatpush1.msra.mxu0 0.0
      %572 = vmatprep.subr.mxu0 0.0
      %573 = vmatpush1.msra.mxu0 0.0
      %574 = vmatprep.subr.mxu0 0.0
      %575 = vmatpush1.msra.mxu0 0.0
      %576 = vmatprep.subr.mxu0 0.0
      %577 = vmatpush1.msra.mxu0 0.0
      %578 = vmatprep.subr.mxu0 0.0
      %579 = vmatpush1.msra.mxu0 0.0
      %580 = vmatprep.subr.mxu0 0.0
      %581 = vmatpush1.msra.mxu0 0.0
      %582 = vmatprep.subr.mxu0 0.0
      %583 = vmatpush1.msra.mxu0 0.0
      %584 = vmatprep.subr.mxu0 0.0
      %585 = vmatpush1.msra.mxu0 0.0
      %586 = vmatprep.subr.mxu0 0.0
      %587 = vmatpush1.msra.mxu0 0.0
      %588 = vmatprep.subr.mxu0 0.0
      %589 = vmatpush1.msra.mxu0 0.0
      %590 = vmatprep.subr.mxu0 0.0
      %591 = vmatpush1.msra.mxu0 0.0
      %592 = vmatprep.mubr.f32.mxu0 0.0
      %593 = vmatmul.mubr.f32.gmra.mrb[0].mxu0 %v523
      %v594 = vpop.f32.mrb[0].mxu0
      %v595 = vadd.f32 0.0, %v594
      %v596 = vpop.f32.mrb[0].mxu0
      %597 = vdwg.mxu0
      %v598 = vadd.f32 %v519, %v595
      %600 = vset.pattern.permute.xlu0 0
      %601 = vperm.xlu0 %600, %v366
      %v602 = vpop.permute.xlu0 %601
      %v604 = vadd.f32 %v598, %v602
      %v606 = vsel %vm372, %v355, 0
      %608 = vmatprep.subr.mxu0 0.0
      %609 = vmatpush1.msra.mxu0 %v606
      %610 = vmatprep.subr.mxu0 0.0
      %611 = vmatpush1.msra.mxu0 0.0
      %612 = vmatprep.subr.mxu0 0.0
      %613 = vmatpush1.msra.mxu0 0.0
      %614 = vmatprep.subr.mxu0 0.0
      %615 = vmatpush1.msra.mxu0 0.0
      %616 = vmatprep.subr.mxu0 0.0
      %617 = vmatpush1.msra.mxu0 0.0
      %618 = vmatprep.subr.mxu0 0.0
      %619 = vmatpush1.msra.mxu0 0.0
      %620 = vmatprep.subr.mxu0 0.0
      %621 = vmatpush1.msra.mxu0 0.0
      %622 = vmatprep.subr.mxu0 0.0
      %623 = vmatpush1.msra.mxu0 0.0
      %624 = vmatprep.subr.mxu0 0.0
      %625 = vmatpush1.msra.mxu0 0.0
      %626 = vmatprep.subr.mxu0 0.0
      %627 = vmatpush1.msra.mxu0 0.0
      %628 = vmatprep.subr.mxu0 0.0
      %629 = vmatpush1.msra.mxu0 0.0
      %630 = vmatprep.subr.mxu0 0.0
      %631 = vmatpush1.msra.mxu0 0.0
      %632 = vmatprep.subr.mxu0 0.0
      %633 = vmatpush1.msra.mxu0 0.0
      %634 = vmatprep.subr.mxu0 0.0
      %635 = vmatpush1.msra.mxu0 0.0
      %636 = vmatprep.subr.mxu0 0.0
      %637 = vmatpush1.msra.mxu0 0.0
      %638 = vmatprep.subr.mxu0 0.0
      %639 = vmatpush1.msra.mxu0 0.0
      %640 = vmatprep.subr.mxu0 0.0
      %641 = vmatpush1.msra.mxu0 0.0
      %642 = vmatprep.subr.mxu0 0.0
      %643 = vmatpush1.msra.mxu0 0.0
      %644 = vmatprep.subr.mxu0 0.0
      %645 = vmatpush1.msra.mxu0 0.0
      %646 = vmatprep.subr.mxu0 0.0
      %647 = vmatpush1.msra.mxu0 0.0
      %648 = vmatprep.subr.mxu0 0.0
      %649 = vmatpush1.msra.mxu0 0.0
      %650 = vmatprep.subr.mxu0 0.0
      %651 = vmatpush1.msra.mxu0 0.0
      %652 = vmatprep.subr.mxu0 0.0
      %653 = vmatpush1.msra.mxu0 0.0
      %654 = vmatprep.subr.mxu0 0.0
      %655 = vmatpush1.msra.mxu0 0.0
      %656 = vmatprep.subr.mxu0 0.0
      %657 = vmatpush1.msra.mxu0 0.0
      %658 = vmatprep.subr.mxu0 0.0
      %659 = vmatpush1.msra.mxu0 0.0
      %660 = vmatprep.subr.mxu0 0.0
      %661 = vmatpush1.msra.mxu0 0.0
      %662 = vmatprep.subr.mxu0 0.0
      %663 = vmatpush1.msra.mxu0 0.0
      %664 = vmatprep.subr.mxu0 0.0
      %665 = vmatpush1.msra.mxu0 0.0
      %666 = vmatprep.subr.mxu0 0.0
      %667 = vmatpush1.msra.mxu0 0.0
      %668 = vmatprep.subr.mxu0 0.0
      %669 = vmatpush1.msra.mxu0 0.0
      %670 = vmatprep.subr.mxu0 0.0
      %671 = vmatpush1.msra.mxu0 0.0
      %672 = vmatprep.mubr.f32.mxu0 0.0
      %673 = vmatmul.mubr.f32.gmra.mrb[0].mxu0 %v370
      %v674 = vpop.f32.mrb[0].mxu0
      %v675 = vadd.f32 0.0, %v674
      %v676 = vpop.f32.mrb[0].mxu0
      %677 = vdwg.mxu0
      %678 = vmatprep.subr.mxu0 0.0
      %679 = vmatpush1.msra.mxu0 %v526
      %680 = vmatprep.subr.mxu0 0.0
      %681 = vmatpush1.msra.mxu0 0.0
      %682 = vmatprep.subr.mxu0 0.0
      %683 = vmatpush1.msra.mxu0 0.0
      %684 = vmatprep.subr.mxu0 0.0
      %685 = vmatpush1.msra.mxu0 0.0
      %686 = vmatprep.subr.mxu0 0.0
      %687 = vmatpush1.msra.mxu0 0.0
      %688 = vmatprep.subr.mxu0 0.0
      %689 = vmatpush1.msra.mxu0 0.0
      %690 = vmatprep.subr.mxu0 0.0
      %691 = vmatpush1.msra.mxu0 0.0
      %692 = vmatprep.subr.mxu0 0.0
      %693 = vmatpush1.msra.mxu0 0.0
      %694 = vmatprep.subr.mxu0 0.0
      %695 = vmatpush1.msra.mxu0 0.0
      %696 = vmatprep.subr.mxu0 0.0
      %697 = vmatpush1.msra.mxu0 0.0
      %698 = vmatprep.subr.mxu0 0.0
      %699 = vmatpush1.msra.mxu0 0.0
      %700 = vmatprep.subr.mxu0 0.0
      %701 = vmatpush1.msra.mxu0 0.0
      %702 = vmatprep.subr.mxu0 0.0
      %703 = vmatpush1.msra.mxu0 0.0
      %704 = vmatprep.subr.mxu0 0.0
      %705 = vmatpush1.msra.mxu0 0.0
      %706 = vmatprep.subr.mxu0 0.0
      %707 = vmatpush1.msra.mxu0 0.0
      %708 = vmatprep.subr.mxu0 0.0
      %709 = vmatpush1.msra.mxu0 0.0
      %710 = vmatprep.subr.mxu0 0.0
      %711 = vmatpush1.msra.mxu0 0.0
      %712 = vmatprep.subr.mxu0 0.0
      %713 = vmatpush1.msra.mxu0 0.0
      %714 = vmatprep.subr.mxu0 0.0
      %715 = vmatpush1.msra.mxu0 0.0
      %716 = vmatprep.subr.mxu0 0.0
      %717 = vmatpush1.msra.mxu0 0.0
      %718 = vmatprep.subr.mxu0 0.0
      %719 = vmatpush1.msra.mxu0 0.0
      %720 = vmatprep.subr.mxu0 0.0
      %721 = vmatpush1.msra.mxu0 0.0
      %722 = vmatprep.subr.mxu0 0.0
      %723 = vmatpush1.msra.mxu0 0.0
      %724 = vmatprep.subr.mxu0 0.0
      %725 = vmatpush1.msra.mxu0 0.0
      %726 = vmatprep.subr.mxu0 0.0
      %727 = vmatpush1.msra.mxu0 0.0
      %728 = vmatprep.subr.mxu0 0.0
      %729 = vmatpush1.msra.mxu0 0.0
      %730 = vmatprep.subr.mxu0 0.0
      %731 = vmatpush1.msra.mxu0 0.0
      %732 = vmatprep.subr.mxu0 0.0
      %733 = vmatpush1.msra.mxu0 0.0
      %734 = vmatprep.subr.mxu0 0.0
      %735 = vmatpush1.msra.mxu0 0.0
      %736 = vmatprep.subr.mxu0 0.0
      %737 = vmatpush1.msra.mxu0 0.0
      %738 = vmatprep.subr.mxu0 0.0
      %739 = vmatpush1.msra.mxu0 0.0
      %740 = vmatprep.subr.mxu0 0.0
      %741 = vmatpush1.msra.mxu0 0.0
      %742 = vmatprep.mubr.f32.mxu0 0.0
      %743 = vmatmul.mubr.f32.gmra.mrb[0].mxu0 %v447
      %v744 = vpop.f32.mrb[0].mxu0
      %v745 = vadd.f32 %v675, %v744
      %v746 = vpop.f32.mrb[0].mxu0
      %747 = vdwg.mxu0
      %748 = vrot.lane.b32.xlu0 %v352, 127
      %v749 = vpop.permute.xlu0 %748
      %v750 = vsel %vm372, %v749, 0
      %752 = vmatprep.subr.mxu0 0.0
      %753 = vmatpush1.msra.mxu0 %v750
      %754 = vmatprep.subr.mxu0 0.0
      %755 = vmatpush1.msra.mxu0 0.0
      %756 = vmatprep.subr.mxu0 0.0
      %757 = vmatpush1.msra.mxu0 0.0
      %758 = vmatprep.subr.mxu0 0.0
      %759 = vmatpush1.msra.mxu0 0.0
      %760 = vmatprep.subr.mxu0 0.0
      %761 = vmatpush1.msra.mxu0 0.0
      %762 = vmatprep.subr.mxu0 0.0
      %763 = vmatpush1.msra.mxu0 0.0
      %764 = vmatprep.subr.mxu0 0.0
      %765 = vmatpush1.msra.mxu0 0.0
      %766 = vmatprep.subr.mxu0 0.0
      %767 = vmatpush1.msra.mxu0 0.0
      %768 = vmatprep.subr.mxu0 0.0
      %769 = vmatpush1.msra.mxu0 0.0
      %770 = vmatprep.subr.mxu0 0.0
      %771 = vmatpush1.msra.mxu0 0.0
      %772 = vmatprep.subr.mxu0 0.0
      %773 = vmatpush1.msra.mxu0 0.0
      %774 = vmatprep.subr.mxu0 0.0
      %775 = vmatpush1.msra.mxu0 0.0
      %776 = vmatprep.subr.mxu0 0.0
      %777 = vmatpush1.msra.mxu0 0.0
      %778 = vmatprep.subr.mxu0 0.0
      %779 = vmatpush1.msra.mxu0 0.0
      %780 = vmatprep.subr.mxu0 0.0
      %781 = vmatpush1.msra.mxu0 0.0
      %782 = vmatprep.subr.mxu0 0.0
      %783 = vmatpush1.msra.mxu0 0.0
      %784 = vmatprep.subr.mxu0 0.0
      %785 = vmatpush1.msra.mxu0 0.0
      %786 = vmatprep.subr.mxu0 0.0
      %787 = vmatpush1.msra.mxu0 0.0
      %788 = vmatprep.subr.mxu0 0.0
      %789 = vmatpush1.msra.mxu0 0.0
      %790 = vmatprep.subr.mxu0 0.0
      %791 = vmatpush1.msra.mxu0 0.0
      %792 = vmatprep.subr.mxu0 0.0
      %793 = vmatpush1.msra.mxu0 0.0
      %794 = vmatprep.subr.mxu0 0.0
      %795 = vmatpush1.msra.mxu0 0.0
      %796 = vmatprep.subr.mxu0 0.0
      %797 = vmatpush1.msra.mxu0 0.0
      %798 = vmatprep.subr.mxu0 0.0
      %799 = vmatpush1.msra.mxu0 0.0
      %800 = vmatprep.subr.mxu0 0.0
      %801 = vmatpush1.msra.mxu0 0.0
      %802 = vmatprep.subr.mxu0 0.0
      %803 = vmatpush1.msra.mxu0 0.0
      %804 = vmatprep.subr.mxu0 0.0
      %805 = vmatpush1.msra.mxu0 0.0
      %806 = vmatprep.subr.mxu0 0.0
      %807 = vmatpush1.msra.mxu0 0.0
      %808 = vmatprep.subr.mxu0 0.0
      %809 = vmatpush1.msra.mxu0 0.0
      %810 = vmatprep.subr.mxu0 0.0
      %811 = vmatpush1.msra.mxu0 0.0
      %812 = vmatprep.subr.mxu0 0.0
      %813 = vmatpush1.msra.mxu0 0.0
      %814 = vmatprep.subr.mxu0 0.0
      %815 = vmatpush1.msra.mxu0 0.0
      %816 = vmatprep.mubr.f32.mxu0 0.0
      %817 = vmatmul.mubr.f32.gmra.mrb[0].mxu0 %v523
      %v818 = vpop.f32.mrb[0].mxu0
      %v819 = vadd.f32 0.0, %v818
      %v820 = vpop.f32.mrb[0].mxu0
      %821 = vdwg.mxu0
      %v822 = vadd.f32 %v745, %v819
      %v823 = vadd.f32 %v822, %v602
      %vm824 = vcmask 64512
      %v826 = vsel %vm824, %v363, 0
      %828 = vmatprep.subr.mxu0 0.0
      %829 = vmatpush1.msra.mxu0 %v823
      %830 = vmatprep.subr.mxu0 0.0
      %831 = vmatpush1.msra.mxu0 0.0
      %832 = vmatprep.subr.mxu0 0.0
      %833 = vmatpush1.msra.mxu0 0.0
      %834 = vmatprep.subr.mxu0 0.0
      %835 = vmatpush1.msra.mxu0 0.0
      %836 = vmatprep.subr.mxu0 0.0
      %837 = vmatpush1.msra.mxu0 0.0
      %838 = vmatprep.subr.mxu0 0.0
      %839 = vmatpush1.msra.mxu0 0.0
      %840 = vmatprep.subr.mxu0 0.0
      %841 = vmatpush1.msra.mxu0 0.0
      %842 = vmatprep.subr.mxu0 0.0
      %843 = vmatpush1.msra.mxu0 0.0
      %844 = vmatprep.subr.mxu0 0.0
      %845 = vmatpush1.msra.mxu0 0.0
      %846 = vmatprep.subr.mxu0 0.0
      %847 = vmatpush1.msra.mxu0 0.0
      %848 = vmatprep.subr.mxu0 0.0
      %849 = vmatpush1.msra.mxu0 0.0
      %850 = vmatprep.subr.mxu0 0.0
      %851 = vmatpush1.msra.mxu0 0.0
      %852 = vmatprep.subr.mxu0 0.0
      %853 = vmatpush1.msra.mxu0 0.0
      %854 = vmatprep.subr.mxu0 0.0
      %855 = vmatpush1.msra.mxu0 0.0
      %856 = vmatprep.subr.mxu0 0.0
      %857 = vmatpush1.msra.mxu0 0.0
      %858 = vmatprep.subr.mxu0 0.0
      %859 = vmatpush1.msra.mxu0 0.0
      %860 = vmatprep.subr.mxu0 0.0
      %861 = vmatpush1.msra.mxu0 0.0
      %862 = vmatprep.subr.mxu0 0.0
      %863 = vmatpush1.msra.mxu0 0.0
      %864 = vmatprep.subr.mxu0 0.0
      %865 = vmatpush1.msra.mxu0 0.0
      %866 = vmatprep.subr.mxu0 0.0
      %867 = vmatpush1.msra.mxu0 0.0
      %868 = vmatprep.subr.mxu0 0.0
      %869 = vmatpush1.msra.mxu0 0.0
      %870 = vmatprep.subr.mxu0 0.0
      %871 = vmatpush1.msra.mxu0 0.0
      %872 = vmatprep.subr.mxu0 0.0
      %873 = vmatpush1.msra.mxu0 0.0
      %874 = vmatprep.subr.mxu0 0.0
      %875 = vmatpush1.msra.mxu0 0.0
      %876 = vmatprep.subr.mxu0 0.0
      %877 = vmatpush1.msra.mxu0 0.0
      %878 = vmatprep.subr.mxu0 0.0
      %879 = vmatpush1.msra.mxu0 0.0
      %880 = vmatprep.subr.mxu0 0.0
      %881 = vmatpush1.msra.mxu0 0.0
      %882 = vmatprep.subr.mxu0 0.0
      %883 = vmatpush1.msra.mxu0 0.0
      %884 = vmatprep.subr.mxu0 0.0
      %885 = vmatpush1.msra.mxu0 0.0
      %886 = vmatprep.subr.mxu0 0.0
      %887 = vmatpush1.msra.mxu0 0.0
      %888 = vmatprep.subr.mxu0 0.0
      %889 = vmatpush1.msra.mxu0 0.0
      %890 = vmatprep.subr.mxu0 0.0
      %891 = vmatpush1.msra.mxu0 0.0
      %892 = vmatprep.mubr.f32.mxu0 0.0
      %893 = vmatmul.mubr.f32.gmra.mrb[0].mxu0 %v826
      %v894 = vpop.f32.mrb[0].mxu0
      %v895 = vadd.f32 0.0, %v894
      %v896 = vpop.f32.mrb[0].mxu0
      %897 = vdwg.mxu0
      %v899 = vsel %vm824, %v361, 0
      %901 = vmatprep.subr.mxu0 0.0
      %902 = vmatpush1.msra.mxu0 %v604
      %903 = vmatprep.subr.mxu0 0.0
      %904 = vmatpush1.msra.mxu0 0.0
      %905 = vmatprep.subr.mxu0 0.0
      %906 = vmatpush1.msra.mxu0 0.0
      %907 = vmatprep.subr.mxu0 0.0
      %908 = vmatpush1.msra.mxu0 0.0
      %909 = vmatprep.subr.mxu0 0.0
      %910 = vmatpush1.msra.mxu0 0.0
      %911 = vmatprep.subr.mxu0 0.0
      %912 = vmatpush1.msra.mxu0 0.0
      %913 = vmatprep.subr.mxu0 0.0
      %914 = vmatpush1.msra.mxu0 0.0
      %915 = vmatprep.subr.mxu0 0.0
      %916 = vmatpush1.msra.mxu0 0.0
      %917 = vmatprep.subr.mxu0 0.0
      %918 = vmatpush1.msra.mxu0 0.0
      %919 = vmatprep.subr.mxu0 0.0
      %920 = vmatpush1.msra.mxu0 0.0
      %921 = vmatprep.subr.mxu0 0.0
      %922 = vmatpush1.msra.mxu0 0.0
      %923 = vmatprep.subr.mxu0 0.0
      %924 = vmatpush1.msra.mxu0 0.0
      %925 = vmatprep.subr.mxu0 0.0
      %926 = vmatpush1.msra.mxu0 0.0
      %927 = vmatprep.subr.mxu0 0.0
      %928 = vmatpush1.msra.mxu0 0.0
      %929 = vmatprep.subr.mxu0 0.0
      %930 = vmatpush1.msra.mxu0 0.0
      %931 = vmatprep.subr.mxu0 0.0
      %932 = vmatpush1.msra.mxu0 0.0
      %933 = vmatprep.subr.mxu0 0.0
      %934 = vmatpush1.msra.mxu0 0.0
      %935 = vmatprep.subr.mxu0 0.0
      %936 = vmatpush1.msra.mxu0 0.0
      %937 = vmatprep.subr.mxu0 0.0
      %938 = vmatpush1.msra.mxu0 0.0
      %939 = vmatprep.subr.mxu0 0.0
      %940 = vmatpush1.msra.mxu0 0.0
      %941 = vmatprep.subr.mxu0 0.0
      %942 = vmatpush1.msra.mxu0 0.0
      %943 = vmatprep.subr.mxu0 0.0
      %944 = vmatpush1.msra.mxu0 0.0
      %945 = vmatprep.subr.mxu0 0.0
      %946 = vmatpush1.msra.mxu0 0.0
      %947 = vmatprep.subr.mxu0 0.0
      %948 = vmatpush1.msra.mxu0 0.0
      %949 = vmatprep.subr.mxu0 0.0
      %950 = vmatpush1.msra.mxu0 0.0
      %951 = vmatprep.subr.mxu0 0.0
      %952 = vmatpush1.msra.mxu0 0.0
      %953 = vmatprep.subr.mxu0 0.0
      %954 = vmatpush1.msra.mxu0 0.0
      %955 = vmatprep.subr.mxu0 0.0
      %956 = vmatpush1.msra.mxu0 0.0
      %957 = vmatprep.subr.mxu0 0.0
      %958 = vmatpush1.msra.mxu0 0.0
      %959 = vmatprep.subr.mxu0 0.0
      %960 = vmatpush1.msra.mxu0 0.0
      %961 = vmatprep.subr.mxu0 0.0
      %962 = vmatpush1.msra.mxu0 0.0
      %963 = vmatprep.subr.mxu0 0.0
      %964 = vmatpush1.msra.mxu0 0.0
      %965 = vmatprep.mubr.f32.mxu0 0.0
      %966 = vmatmul.mubr.f32.gmra.mrb[0].mxu0 %v899
      %v967 = vpop.f32.mrb[0].mxu0
      %v968 = vadd.f32 %v895, %v967
      %v969 = vpop.f32.mrb[0].mxu0
      %970 = vdwg.mxu0
      %972 = vrot.lane.b32.xlu0 %v604, 127
      %v973 = vpop.permute.xlu0 %972
      %v976 = vsel %vm824, %v365, 0
      %978 = vmatprep.subr.mxu0 0.0
      %979 = vmatpush1.msra.mxu0 %v973
      %980 = vmatprep.subr.mxu0 0.0
      %981 = vmatpush1.msra.mxu0 0.0
      %982 = vmatprep.subr.mxu0 0.0
      %983 = vmatpush1.msra.mxu0 0.0
      %984 = vmatprep.subr.mxu0 0.0
      %985 = vmatpush1.msra.mxu0 0.0
      %986 = vmatprep.subr.mxu0 0.0
      %987 = vmatpush1.msra.mxu0 0.0
      %988 = vmatprep.subr.mxu0 0.0
      %989 = vmatpush1.msra.mxu0 0.0
      %990 = vmatprep.subr.mxu0 0.0
      %991 = vmatpush1.msra.mxu0 0.0
      %992 = vmatprep.subr.mxu0 0.0
      %993 = vmatpush1.msra.mxu0 0.0
      %994 = vmatprep.subr.mxu0 0.0
      %995 = vmatpush1.msra.mxu0 0.0
      %996 = vmatprep.subr.mxu0 0.0
      %997 = vmatpush1.msra.mxu0 0.0
      %998 = vmatprep.subr.mxu0 0.0
      %999 = vmatpush1.msra.mxu0 0.0
      %1000 = vmatprep.subr.mxu0 0.0
      %1001 = vmatpush1.msra.mxu0 0.0
      %1002 = vmatprep.subr.mxu0 0.0
      %1003 = vmatpush1.msra.mxu0 0.0
      %1004 = vmatprep.subr.mxu0 0.0
      %1005 = vmatpush1.msra.mxu0 0.0
      %1006 = vmatprep.subr.mxu0 0.0
      %1007 = vmatpush1.msra.mxu0 0.0
      %1008 = vmatprep.subr.mxu0 0.0
      %1009 = vmatpush1.msra.mxu0 0.0
      %1010 = vmatprep.subr.mxu0 0.0
      %1011 = vmatpush1.msra.mxu0 0.0
      %1012 = vmatprep.subr.mxu0 0.0
      %1013 = vmatpush1.msra.mxu0 0.0
      %1014 = vmatprep.subr.mxu0 0.0
      %1015 = vmatpush1.msra.mxu0 0.0
      %1016 = vmatprep.subr.mxu0 0.0
      %1017 = vmatpush1.msra.mxu0 0.0
      %1018 = vmatprep.subr.mxu0 0.0
      %1019 = vmatpush1.msra.mxu0 0.0
      %1020 = vmatprep.subr.mxu0 0.0
      %1021 = vmatpush1.msra.mxu0 0.0
      %1022 = vmatprep.subr.mxu0 0.0
      %1023 = vmatpush1.msra.mxu0 0.0
      %1024 = vmatprep.subr.mxu0 0.0
      %1025 = vmatpush1.msra.mxu0 0.0
      %1026 = vmatprep.subr.mxu0 0.0
      %1027 = vmatpush1.msra.mxu0 0.0
      %1028 = vmatprep.subr.mxu0 0.0
      %1029 = vmatpush1.msra.mxu0 0.0
      %1030 = vmatprep.subr.mxu0 0.0
      %1031 = vmatpush1.msra.mxu0 0.0
      %1032 = vmatprep.subr.mxu0 0.0
      %1033 = vmatpush1.msra.mxu0 0.0
      %1034 = vmatprep.subr.mxu0 0.0
      %1035 = vmatpush1.msra.mxu0 0.0
      %1036 = vmatprep.subr.mxu0 0.0
      %1037 = vmatpush1.msra.mxu0 0.0
      %1038 = vmatprep.subr.mxu0 0.0
      %1039 = vmatpush1.msra.mxu0 0.0
      %1040 = vmatprep.subr.mxu0 0.0
      %1041 = vmatpush1.msra.mxu0 0.0
      %1042 = vmatprep.mubr.f32.mxu0 0.0
      %1043 = vmatmul.mubr.f32.gmra.mrb[0].mxu0 %v976
      %v1044 = vpop.f32.mrb[0].mxu0
      %v1045 = vadd.f32 0.0, %v1044
      %v1046 = vpop.f32.mrb[0].mxu0
      %1047 = vdwg.mxu0
      %v1048 = vadd.f32 %v968, %v1045
      %1050 = vset.pattern.permute.xlu0 0
      %1051 = vperm.xlu0 %1050, %v367
      %v1052 = vpop.permute.xlu0 %1051
      %v1054 = vadd.f32 %v1048, %v1052
      %vm1055 = vcmask 23552
      %1056 = vst.msk [vmem:[%s351] sm:$0xff] %vm1055, %v1054
      %p1057 = scmp.lt.s32.totalorder %s19, 1
      %s1058 = scalar_select %p1057, %s19, 1
      %s1059 = smul.addr %s1058, 8
      %s1060 = scalar_lea.vmem %s8, %s1059
      // Predicated region
      $region53: #{conv1d_subsampling.1} parent=51 // pred_check
        %p1061 = pneg %p225
      $region54: #{conv1d_subsampling.1} parent=51 // pred_check_branch
        %1063 = sbr.rel (%p1061) target = $region56
      $region55: #{conv1d_subsampling.1} parent=51 // pred_region
        _
      $region56: #{conv1d_subsampling.1} parent=51 // pred_fallthru
        _
    $region52: #{conv1d_subsampling.1} parent=5 // pred_fallthru
      _
    %p1064 = scmp.le.s32.totalorder 2, %s14
    // Predicated region
    $region57: #{conv1d_subsampling.1} parent=5 // pred_check
      %p1065 = pneg %p1064
    $region58: #{conv1d_subsampling.1} parent=5 // pred_check_branch
      %1067 = sbr.rel (%p1065) target = $region60
    $region59: #{conv1d_subsampling.1} parent=5 // pred_region
      %s1068 = ssub.s32 %s14, 2
      // Predicated region
      $region61: #{conv1d_subsampling.1} parent=59 // pred_check
        %p1069 = pneg %p231
      $region62: #{conv1d_subsampling.1} parent=59 // pred_check_branch
        %1071 = sbr.rel (%p1069) target = $region64
      $region63: #{conv1d_subsampling.1} parent=59 // pred_region
        %p1072 = scmp.lt.s32.totalorder %s20, 1
        %s1073 = scalar_select %p1072, %s20, 1
        %s1074 = smul.addr %s1073, 8
        %s1075 = scalar_lea.vmem %s8, %s1074
      $region64: #{conv1d_subsampling.1} parent=59 // pred_fallthru
        _
    $region60: #{conv1d_subsampling.1} parent=5 // pred_fallthru
      _
  $region6: #{conv1d_subsampling.1} parent=0 // loop_footer
    %s18 = sadd.s32 1, %s14
  $region7: #{conv1d_subsampling.1} parent=0 // loop_footer_branch
    %13 = sbr.rel target = $region3
  $region8: #{conv1d_subsampling.1} parent=0 // loop_exit
    _

</llo_original>
